<compile_context>
chip_gen: v7x
topology: tpu7x:2x2x1
jax: 0.10.0
libtpu: 0.0.40
codegen_flags: <defaults>
</compile_context>

<pallas_src>
import jax
import jax.numpy as jnp
from jax.experimental import pallas as pl
from jax.experimental.pallas import tpu as pltpu

IN_DIM = 4
HID_DIM = 10
OUT_DIM = 3

# Lane-dense batch tile (multiple of 128).  ~16 MiB working set at 65536
# (x/out double buffers + f32 intermediates), safe on v5e/v6e (128 MiB VMEM)
# and v7x (64 MiB VMEM).
TILE_B = 65536


def _round_up(x, m):
    return (x + m - 1) // m * m


def mlp_kernel(x_ref, w1_ref, b1_ref, w2_ref, b2_ref, w3_ref, b3_ref, o_ref):
    # x_ref: (IN_DIM, tb)  -- batch on the 128-lane axis
    # wN_ref: (out, in) torch layout; bN_ref: (out, 1); o_ref: (OUT_DIM, tb)
    x = x_ref[...]
    h1 = jnp.dot(w1_ref[...], x, preferred_element_type=jnp.float32) + b1_ref[...]
    h1 = jnp.maximum(h1, 0.0)
    h2 = jnp.dot(w2_ref[...], h1, preferred_element_type=jnp.float32) + b2_ref[...]
    h2 = jnp.maximum(h2, 0.0)
    out = jnp.dot(w3_ref[...], h2, preferred_element_type=jnp.float32) + b3_ref[...]
    o_ref[...] = out.astype(o_ref.dtype)


@jax.jit
def mlp_forward(x, w1, b1, w2, b2, w3, b3):
    """x: (B, IN_DIM) like torch; weights (out, in); biases (out,). Returns (B, OUT_DIM)."""
    B = x.shape[0]

    # Batch-minor layout: one small transpose so kernel I/O is lane-dense.
    xT = x.T  # (IN_DIM, B)

    # Pad only to the 128-lane quantum (never to a multiple of the tile).
    Bp = _round_up(B, 128)
    if Bp != B:
        xT = jnp.pad(xT, ((0, 0), (0, Bp - B)))

    # Tile size: as large as comfortably fits VMEM; split >=2 ways when the
    # batch allows so both v7x TensorCores get work (harmless on v5e/v6e).
    if Bp <= 128:
        tb = Bp
    elif Bp <= TILE_B:
        tb = _round_up(-(-Bp // 2), 128)
    else:
        tb = TILE_B
    grid = (pl.cdiv(Bp, tb),)

    b1c = b1.reshape(HID_DIM, 1)
    b2c = b2.reshape(HID_DIM, 1)
    b3c = b3.reshape(OUT_DIM, 1)

    const2d = lambda shape: pl.BlockSpec(shape, lambda i: (0, 0))  # VMEM-resident weights/biases

    cost = pl.CostEstimate(
        flops=2 * Bp * (IN_DIM * HID_DIM + HID_DIM * HID_DIM + HID_DIM * OUT_DIM),
        transcendentals=0,
        bytes_accessed=4 * (
            Bp * (IN_DIM + OUT_DIM)
            + IN_DIM * HID_DIM + HID_DIM * HID_DIM + HID_DIM * OUT_DIM
            + 2 * HID_DIM + OUT_DIM
        ),
    )

    outT = pl.pallas_call(
        mlp_kernel,
        out_shape=jax.ShapeDtypeStruct((OUT_DIM, Bp), jnp.float32),
        grid=grid,
        in_specs=[
            pl.BlockSpec((IN_DIM, tb), lambda i: (0, i)),  # x tile: batch-minor, lane-dense
            const2d((HID_DIM, IN_DIM)),
            const2d((HID_DIM, 1)),
            const2d((HID_DIM, HID_DIM)),
            const2d((HID_DIM, 1)),
            const2d((OUT_DIM, HID_DIM)),
            const2d((OUT_DIM, 1)),
        ],
        out_specs=pl.BlockSpec((OUT_DIM, tb), lambda i: (0, i)),
        compiler_params=pltpu.CompilerParams(
            dimension_semantics=("parallel",),       # megacore sharding on v7x
            vmem_limit_bytes=48 * 1024 * 1024,        # headroom on all generations, < v7x 64 MiB
        ),
        cost_estimate=cost,
    )(xT, w1, b1c, w2, b2c, w3, b3c)

    # Drop padded lanes (no-op slice when Bp == B) and return torch layout.
    return outT[:, :B].T  # (B, OUT_DIM)


def init_linear(key, fan_in, fan_out):
    # PyTorch default init: uniform(-1/sqrt(fan_in), 1/sqrt(fan_in)), weight stored (out, in).
    kw, kb = jax.random.split(key)
    bound = 1.0 / jnp.sqrt(float(fan_in))
    w = jax.random.uniform(kw, (fan_out, fan_in), jnp.float32, -bound, bound)
    b = jax.random.uniform(kb, (fan_out,), jnp.float32, -bound, bound)
    return w, b


def reference_mlp(x, w1, b1, w2, b2, w3, b3):
    h1 = jnp.maximum(x @ w1.T + b1, 0.0)
    h2 = jnp.maximum(h1 @ w2.T + b2, 0.0)
    return h2 @ w3.T + b3


if __name__ == "__main__":
    key = jax.random.PRNGKey(0)
    kx, k1, k2, k3 = jax.random.split(key, 4)

    B = 8
    x = jax.random.normal(kx, (B, IN_DIM), jnp.float32)

    w1, b1 = init_linear(k1, IN_DIM, HID_DIM)
    w2, b2 = init_linear(k2, HID_DIM, HID_DIM)
    w3, b3 = init_linear(k3, HID_DIM, OUT_DIM)

    out = mlp_forward(x, w1, b1, w2, b2, w3, b3)
    out = jax.block_until_ready(out)

    ref = reference_mlp(x, w1, b1, w2, b2, w3, b3)
    assert out.shape == (B, OUT_DIM)
    assert jnp.allclose(out, ref, atol=1e-5, rtol=1e-5)

    print("KERNEL_OK")
</pallas_src>

<mosaic_0001>
module attributes {stable_mosaic.version = 11 : i64} {
  func.func @mlp_kernel(%arg0: i32, %arg1: memref<4x128xf32, #tpu.memory_space<vmem>>, %arg2: memref<10x4xf32, #tpu.memory_space<vmem>>, %arg3: memref<10x1xf32, #tpu.memory_space<vmem>>, %arg4: memref<10x10xf32, #tpu.memory_space<vmem>>, %arg5: memref<10x1xf32, #tpu.memory_space<vmem>>, %arg6: memref<3x10xf32, #tpu.memory_space<vmem>>, %arg7: memref<3x1xf32, #tpu.memory_space<vmem>>, %arg8: memref<3x128xf32, #tpu.memory_space<vmem>>) attributes {dimension_semantics = [#tpu.dimension_semantics<parallel>], iteration_bounds = array<i64: 1>, scalar_prefetch = 0 : i64, scratch_operands = 0 : i64, tpu.core_type = #tpu.core_type<tc>, window_params = [{transform_indices = @transform_0, window_bounds = array<i64: 4, 128>}, {pipeline_mode = #tpu.pipeline_mode<synchronous>, transform_indices = @transform_1, window_bounds = array<i64: 10, 4>}, {pipeline_mode = #tpu.pipeline_mode<synchronous>, transform_indices = @transform_2, window_bounds = array<i64: 10, 1>}, {pipeline_mode = #tpu.pipeline_mode<synchronous>, transform_indices = @transform_3, window_bounds = array<i64: 10, 10>}, {pipeline_mode = #tpu.pipeline_mode<synchronous>, transform_indices = @transform_4, window_bounds = array<i64: 10, 1>}, {pipeline_mode = #tpu.pipeline_mode<synchronous>, transform_indices = @transform_5, window_bounds = array<i64: 3, 10>}, {pipeline_mode = #tpu.pipeline_mode<synchronous>, transform_indices = @transform_6, window_bounds = array<i64: 3, 1>}, {transform_indices = @transform_7, window_bounds = array<i64: 3, 128>}]} {
    %c0 = arith.constant 0 : index
    %c0_0 = arith.constant 0 : index
    %0 = vector.load %arg1[%c0, %c0_0] : memref<4x128xf32, #tpu.memory_space<vmem>>, vector<4x128xf32>
    %c0_1 = arith.constant 0 : index
    %c0_2 = arith.constant 0 : index
    %1 = vector.load %arg2[%c0_1, %c0_2] : memref<10x4xf32, #tpu.memory_space<vmem>>, vector<10x4xf32>
    %cst = arith.constant dense<0.000000e+00> : vector<10x128xf32>
    %2 = tpu.matmul %1, %0, %cst {dimension_numbers = #tpu.dot_dimension_numbers<[1], [0], [0], [1], [0, 0, 1, 1], [], []>} : vector<10x4xf32>, vector<4x128xf32>, vector<10x128xf32> -> vector<10x128xf32>
    %c0_3 = arith.constant 0 : index
    %c0_4 = arith.constant 0 : index
    %3 = vector.load %arg3[%c0_3, %c0_4] : memref<10x1xf32, #tpu.memory_space<vmem>>, vector<10x1xf32>
    %4 = vector.broadcast %3 : vector<10x1xf32> to vector<10x128xf32>
    %5 = arith.addf %2, %4 : vector<10x128xf32>
    %cst_5 = arith.constant 0.000000e+00 : f32
    %6 = vector.broadcast %cst_5 : f32 to vector<10x128xf32>
    %7 = arith.maximumf %5, %6 : vector<10x128xf32>
    %c0_6 = arith.constant 0 : index
    %c0_7 = arith.constant 0 : index
    %8 = vector.load %arg4[%c0_6, %c0_7] : memref<10x10xf32, #tpu.memory_space<vmem>>, vector<10x10xf32>
    %cst_8 = arith.constant dense<0.000000e+00> : vector<10x128xf32>
    %9 = tpu.matmul %8, %7, %cst_8 {dimension_numbers = #tpu.dot_dimension_numbers<[1], [0], [0], [1], [0, 0, 1, 1], [], []>} : vector<10x10xf32>, vector<10x128xf32>, vector<10x128xf32> -> vector<10x128xf32>
    %c0_9 = arith.constant 0 : index
    %c0_10 = arith.constant 0 : index
    %10 = vector.load %arg5[%c0_9, %c0_10] : memref<10x1xf32, #tpu.memory_space<vmem>>, vector<10x1xf32>
    %11 = vector.broadcast %10 : vector<10x1xf32> to vector<10x128xf32>
    %12 = arith.addf %9, %11 : vector<10x128xf32>
    %cst_11 = arith.constant 0.000000e+00 : f32
    %13 = vector.broadcast %cst_11 : f32 to vector<10x128xf32>
    %14 = arith.maximumf %12, %13 : vector<10x128xf32>
    %c0_12 = arith.constant 0 : index
    %c0_13 = arith.constant 0 : index
    %15 = vector.load %arg6[%c0_12, %c0_13] : memref<3x10xf32, #tpu.memory_space<vmem>>, vector<3x10xf32>
    %cst_14 = arith.constant dense<0.000000e+00> : vector<3x128xf32>
    %16 = tpu.matmul %15, %14, %cst_14 {dimension_numbers = #tpu.dot_dimension_numbers<[1], [0], [0], [1], [0, 0, 1, 1], [], []>} : vector<3x10xf32>, vector<10x128xf32>, vector<3x128xf32> -> vector<3x128xf32>
    %c0_15 = arith.constant 0 : index
    %c0_16 = arith.constant 0 : index
    %17 = vector.load %arg7[%c0_15, %c0_16] : memref<3x1xf32, #tpu.memory_space<vmem>>, vector<3x1xf32>
    %18 = vector.broadcast %17 : vector<3x1xf32> to vector<3x128xf32>
    %19 = arith.addf %16, %18 : vector<3x128xf32>
    %c0_17 = arith.constant 0 : index
    %c0_18 = arith.constant 0 : index
    %20 = vector.load %arg8[%c0_17, %c0_18] : memref<3x128xf32, #tpu.memory_space<vmem>>, vector<3x128xf32>
    tpu.vector_store %arg8[%c0_17, %c0_18], %19 {strides = array<i32>} : memref<3x128xf32, #tpu.memory_space<vmem>>, vector<3x128xf32>,
    return
  }
  func.func @transform_0(%arg0: i32) -> (i32, i32) {
    %c0_i32 = arith.constant 0 : i32
    %c0_i32_0 = arith.constant 0 : i32
    return %c0_i32, %arg0 : i32, i32
  }
  func.func @transform_1(%arg0: i32) -> (i32, i32) {
    %c0_i32 = arith.constant 0 : i32
    %c0_i32_0 = arith.constant 0 : i32
    %c0_i32_1 = arith.constant 0 : i32
    return %c0_i32, %c0_i32_0 : i32, i32
  }
  func.func @transform_2(%arg0: i32) -> (i32, i32) {
    %c0_i32 = arith.constant 0 : i32
    %c0_i32_0 = arith.constant 0 : i32
    %c0_i32_1 = arith.constant 0 : i32
    return %c0_i32, %c0_i32_0 : i32, i32
  }
  func.func @transform_3(%arg0: i32) -> (i32, i32) {
    %c0_i32 = arith.constant 0 : i32
    %c0_i32_0 = arith.constant 0 : i32
    %c0_i32_1 = arith.constant 0 : i32
    return %c0_i32, %c0_i32_0 : i32, i32
  }
  func.func @transform_4(%arg0: i32) -> (i32, i32) {
    %c0_i32 = arith.constant 0 : i32
    %c0_i32_0 = arith.constant 0 : i32
    %c0_i32_1 = arith.constant 0 : i32
    return %c0_i32, %c0_i32_0 : i32, i32
  }
  func.func @transform_5(%arg0: i32) -> (i32, i32) {
    %c0_i32 = arith.constant 0 : i32
    %c0_i32_0 = arith.constant 0 : i32
    %c0_i32_1 = arith.constant 0 : i32
    return %c0_i32, %c0_i32_0 : i32, i32
  }
  func.func @transform_6(%arg0: i32) -> (i32, i32) {
    %c0_i32 = arith.constant 0 : i32
    %c0_i32_0 = arith.constant 0 : i32
    %c0_i32_1 = arith.constant 0 : i32
    return %c0_i32, %c0_i32_0 : i32, i32
  }
  func.func @transform_7(%arg0: i32) -> (i32, i32) {
    %c0_i32 = arith.constant 0 : i32
    %c0_i32_0 = arith.constant 0 : i32
    return %c0_i32, %arg0 : i32, i32
  }
}

</mosaic_0001>

<llo_original>
// kernel: mlp_forward.1
$region0: #{mlp_forward.1}
  #allocation0 [shape = 'u32[]', space=smem, size = 0x4, offset = 0x4, fixed_abs, tag = 'smem constant byte address 0x4 - core index']
  #allocation1 [shape = 'u32[144,128]{1,0:T(1,128)}', space=vmem, size = 0x12000, scoped, tag = 'internal scratch']
  %s0 = inlined_call_operand.vmem [shape: f32[4,128], index: 0, kind: input, shape index: {}]
  %s1 = inlined_call_operand.vmem [shape: f32[10,4], index: 1, kind: input, shape index: {}]
  %s2 = inlined_call_operand.vmem [shape: f32[10,1], index: 2, kind: input, shape index: {}]
  %s3 = inlined_call_operand.vmem [shape: f32[10,10], index: 3, kind: input, shape index: {}]
  %s4 = inlined_call_operand.vmem [shape: f32[10,1], index: 4, kind: input, shape index: {}]
  %s5 = inlined_call_operand.vmem [shape: f32[3,10], index: 5, kind: input, shape index: {}]
  %s6 = inlined_call_operand.vmem [shape: f32[3,1], index: 6, kind: input, shape index: {}]
  %s7 = inlined_call_operand.vmem [shape: f32[3,128], index: 7, kind: output, shape index: {}]
  %s8 = sld [smem:[#allocation0]]
  $region38: #{mlp_forward.1} parent=0
    _
  %s10 = ssub.s32 1, %s8
  %s11 = scalar_select 0, %s10, %s8
  // Predicated region
  $region2: #{mlp_forward.1} parent=0 // pred_check
    _
  $region3: #{mlp_forward.1} parent=0 // pred_check_branch
    %13 = sbr.rel (0) target = $region5
  $region4: #{mlp_forward.1} parent=0 // pred_region
    _
  $region5: #{mlp_forward.1} parent=0 // pred_fallthru
    _
  // Predicated region
  $region6: #{mlp_forward.1} parent=0 // pred_check
    _
  $region7: #{mlp_forward.1} parent=0 // pred_check_branch
    %15 = sbr.rel (0) target = $region9
  $region8: #{mlp_forward.1} parent=0 // pred_region
    _
  $region9: #{mlp_forward.1} parent=0 // pred_fallthru
    _
  // Predicated region
  $region10: #{mlp_forward.1} parent=0 // pred_check
    _
  $region11: #{mlp_forward.1} parent=0 // pred_check_branch
    %17 = sbr.rel (0) target = $region13
  $region12: #{mlp_forward.1} parent=0 // pred_region
    _
  $region13: #{mlp_forward.1} parent=0 // pred_fallthru
    _
  // Predicated region
  $region14: #{mlp_forward.1} parent=0 // pred_check
    _
  $region15: #{mlp_forward.1} parent=0 // pred_check_branch
    %19 = sbr.rel (0) target = $region17
  $region16: #{mlp_forward.1} parent=0 // pred_region
    _
  $region17: #{mlp_forward.1} parent=0 // pred_fallthru
    _
  // Predicated region
  $region18: #{mlp_forward.1} parent=0 // pred_check
    _
  $region19: #{mlp_forward.1} parent=0 // pred_check_branch
    %21 = sbr.rel (0) target = $region21
  $region20: #{mlp_forward.1} parent=0 // pred_region
    _
  $region21: #{mlp_forward.1} parent=0 // pred_fallthru
    _
  // Predicated region
  $region22: #{mlp_forward.1} parent=0 // pred_check
    _
  $region23: #{mlp_forward.1} parent=0 // pred_check_branch
    %23 = sbr.rel (0) target = $region25
  $region24: #{mlp_forward.1} parent=0 // pred_region
    _
  $region25: #{mlp_forward.1} parent=0 // pred_fallthru
    _
  // Predicated region
  $region26: #{mlp_forward.1} parent=0 // pred_check
    _
  $region27: #{mlp_forward.1} parent=0 // pred_check_branch
    %25 = sbr.rel (0) target = $region29
  $region28: #{mlp_forward.1} parent=0 // pred_region
    _
  $region29: #{mlp_forward.1} parent=0 // pred_fallthru
    _
  %v26 = vld [vmem:[%s0] sm:$0xf]
  %v27 = vld [vmem:[%s1] sm:$0xff]
  %v28 = vld [vmem:[%s1 + $0x8] sm:$0x3]
  %v29 = vld [vmem:[%s2] sm:$0xff]
  %v30 = vld [vmem:[%s2 + $0x8] sm:$0x3]
  %32 = vset.pattern.permute.xlu0 0
  %33 = vperm.xlu0 %32, %v29
  %v34 = vpop.permute.xlu0 %33
  %37 = vset.pattern.permute.xlu0 0
  %38 = vperm.xlu0 %37, %v30
  %v39 = vpop.permute.xlu0 %38
  %vm41 = vcmask 31744
  %v43 = vsel %vm41, %v27, 0
  %v46 = vsel %vm41, %v28, 0
  %vm48 = vcmask 1043456
  %v50 = vsel %vm48, %v26, 0
  %52 = vmatprep.subr.mxu0 0.0
  %53 = vmatpush1.msra.mxu0 %v50
  %54 = vmatprep.subr.mxu0 0.0
  %55 = vmatpush1.msra.mxu0 0.0
  %56 = vmatprep.subr.mxu0 0.0
  %57 = vmatpush1.msra.mxu0 0.0
  %58 = vmatprep.subr.mxu0 0.0
  %59 = vmatpush1.msra.mxu0 0.0
  %60 = vmatprep.subr.mxu0 0.0
  %61 = vmatpush1.msra.mxu0 0.0
  %62 = vmatprep.subr.mxu0 0.0
  %63 = vmatpush1.msra.mxu0 0.0
  %64 = vmatprep.subr.mxu0 0.0
  %65 = vmatpush1.msra.mxu0 0.0
  %66 = vmatprep.subr.mxu0 0.0
  %67 = vmatpush1.msra.mxu0 0.0
  %68 = vmatprep.subr.mxu0 0.0
  %69 = vmatpush1.msra.mxu0 0.0
  %70 = vmatprep.subr.mxu0 0.0
  %71 = vmatpush1.msra.mxu0 0.0
  %72 = vmatprep.subr.mxu0 0.0
  %73 = vmatpush1.msra.mxu0 0.0
  %74 = vmatprep.subr.mxu0 0.0
  %75 = vmatpush1.msra.mxu0 0.0
  %76 = vmatprep.subr.mxu0 0.0
  %77 = vmatpush1.msra.mxu0 0.0
  %78 = vmatprep.subr.mxu0 0.0
  %79 = vmatpush1.msra.mxu0 0.0
  %80 = vmatprep.subr.mxu0 0.0
  %81 = vmatpush1.msra.mxu0 0.0
  %82 = vmatprep.subr.mxu0 0.0
  %83 = vmatpush1.msra.mxu0 0.0
  %84 = vmatprep.subr.mxu0 0.0
  %85 = vmatpush1.msra.mxu0 0.0
  %86 = vmatprep.subr.mxu0 0.0
  %87 = vmatpush1.msra.mxu0 0.0
  %88 = vmatprep.subr.mxu0 0.0
  %89 = vmatpush1.msra.mxu0 0.0
  %90 = vmatprep.subr.mxu0 0.0
  %91 = vmatpush1.msra.mxu0 0.0
  %92 = vmatprep.subr.mxu0 0.0
  %93 = vmatpush1.msra.mxu0 0.0
  %94 = vmatprep.subr.mxu0 0.0
  %95 = vmatpush1.msra.mxu0 0.0
  %96 = vmatprep.subr.mxu0 0.0
  %97 = vmatpush1.msra.mxu0 0.0
  %98 = vmatprep.subr.mxu0 0.0
  %99 = vmatpush1.msra.mxu0 0.0
  %100 = vmatprep.subr.mxu0 0.0
  %101 = vmatpush1.msra.mxu0 0.0
  %102 = vmatprep.subr.mxu0 0.0
  %103 = vmatpush1.msra.mxu0 0.0
  %104 = vmatprep.subr.mxu0 0.0
  %105 = vmatpush1.msra.mxu0 0.0
  %106 = vmatprep.subr.mxu0 0.0
  %107 = vmatpush1.msra.mxu0 0.0
  %108 = vmatprep.subr.mxu0 0.0
  %109 = vmatpush1.msra.mxu0 0.0
  %110 = vmatprep.subr.mxu0 0.0
  %111 = vmatpush1.msra.mxu0 0.0
  %112 = vmatprep.subr.mxu0 0.0
  %113 = vmatpush1.msra.mxu0 0.0
  %114 = vmatprep.subr.mxu0 0.0
  %115 = vmatpush1.msra.mxu0 0.0
  %116 = vmatprep.mubr.f32.mxu0 0.0
  %117 = vmatmul.mubr.f32.gmra.mrb[0].mxu0 %v43
  %v118 = vpop.f32.mrb[0].mxu0
  %v119 = vadd.f32 %v34, %v118
  %v120 = vpop.f32.mrb[0].mxu0
  %121 = vmatprep.mubr.f32.mxu0 0.0
  %122 = vmatmul.mubr.f32.gmra.mrb[0].mxu0 %v46
  %v123 = vpop.f32.mrb[0].mxu0
  %v124 = vadd.f32 %v39, %v123
  %v125 = vpop.f32.mrb[0].mxu0
  %126 = vdwg.mxu0
  %v127 = vmax.f32 %v119, 0.0
  %v128 = vmax.f32 %v124, 0.0
  %v129 = vld [vmem:[%s3] sm:$0xff]
  %v130 = vld [vmem:[%s3 + $0x8] sm:$0x3]
  %v131 = vld [vmem:[%s4] sm:$0xff]
  %v132 = vld [vmem:[%s4 + $0x8] sm:$0x3]
  %134 = vset.pattern.permute.xlu0 0
  %135 = vperm.xlu0 %134, %v131
  %v136 = vpop.permute.xlu0 %135
  %139 = vset.pattern.permute.xlu0 0
  %140 = vperm.xlu0 %139, %v132
  %v141 = vpop.permute.xlu0 %140
  %vm143 = vcmask 80896
  %v145 = vsel %vm143, %v129, 0
  %v148 = vsel %vm143, %v130, 0
  %vm150 = vcmask 1041408
  %v152 = vsel %vm150, %v128, 0
  %154 = vmatprep.subr.mxu0 0.0
  %155 = vmatpush1.msra.mxu0 %v127
  %156 = vmatprep.subr.mxu0 0.0
  %157 = vmatpush1.msra.mxu0 %v152
  %158 = vmatprep.subr.mxu0 0.0
  %159 = vmatpush1.msra.mxu0 0.0
  %160 = vmatprep.subr.mxu0 0.0
  %161 = vmatpush1.msra.mxu0 0.0
  %162 = vmatprep.subr.mxu0 0.0
  %163 = vmatpush1.msra.mxu0 0.0
  %164 = vmatprep.subr.mxu0 0.0
  %165 = vmatpush1.msra.mxu0 0.0
  %166 = vmatprep.subr.mxu0 0.0
  %167 = vmatpush1.msra.mxu0 0.0
  %168 = vmatprep.subr.mxu0 0.0
  %169 = vmatpush1.msra.mxu0 0.0
  %170 = vmatprep.subr.mxu0 0.0
  %171 = vmatpush1.msra.mxu0 0.0
  %172 = vmatprep.subr.mxu0 0.0
  %173 = vmatpush1.msra.mxu0 0.0
  %174 = vmatprep.subr.mxu0 0.0
  %175 = vmatpush1.msra.mxu0 0.0
  %176 = vmatprep.subr.mxu0 0.0
  %177 = vmatpush1.msra.mxu0 0.0
  %178 = vmatprep.subr.mxu0 0.0
  %179 = vmatpush1.msra.mxu0 0.0
  %180 = vmatprep.subr.mxu0 0.0
  %181 = vmatpush1.msra.mxu0 0.0
  %182 = vmatprep.subr.mxu0 0.0
  %183 = vmatpush1.msra.mxu0 0.0
  %184 = vmatprep.subr.mxu0 0.0
  %185 = vmatpush1.msra.mxu0 0.0
  %186 = vmatprep.subr.mxu0 0.0
  %187 = vmatpush1.msra.mxu0 0.0
  %188 = vmatprep.subr.mxu0 0.0
  %189 = vmatpush1.msra.mxu0 0.0
  %190 = vmatprep.subr.mxu0 0.0
  %191 = vmatpush1.msra.mxu0 0.0
  %192 = vmatprep.subr.mxu0 0.0
  %193 = vmatpush1.msra.mxu0 0.0
  %194 = vmatprep.subr.mxu0 0.0
  %195 = vmatpush1.msra.mxu0 0.0
  %196 = vmatprep.subr.mxu0 0.0
  %197 = vmatpush1.msra.mxu0 0.0
  %198 = vmatprep.subr.mxu0 0.0
  %199 = vmatpush1.msra.mxu0 0.0
  %200 = vmatprep.subr.mxu0 0.0
  %201 = vmatpush1.msra.mxu0 0.0
  %202 = vmatprep.subr.mxu0 0.0
  %203 = vmatpush1.msra.mxu0 0.0
  %204 = vmatprep.subr.mxu0 0.0
  %205 = vmatpush1.msra.mxu0 0.0
  %206 = vmatprep.subr.mxu0 0.0
  %207 = vmatpush1.msra.mxu0 0.0
  %208 = vmatprep.subr.mxu0 0.0
  %209 = vmatpush1.msra.mxu0 0.0
  %210 = vmatprep.subr.mxu0 0.0
  %211 = vmatpush1.msra.mxu0 0.0
  %212 = vmatprep.subr.mxu0 0.0
  %213 = vmatpush1.msra.mxu0 0.0
  %214 = vmatprep.subr.mxu0 0.0
  %215 = vmatpush1.msra.mxu0 0.0
  %216 = vmatprep.subr.mxu0 0.0
  %217 = vmatpush1.msra.mxu0 0.0
  %218 = vmatprep.mubr.f32.mxu0 0.0
  %219 = vmatmul.mubr.f32.gmra.mrb[0].mxu0 %v145
  %v220 = vpop.f32.mrb[0].mxu0
  %v221 = vadd.f32 %v136, %v220
  %v222 = vpop.f32.mrb[0].mxu0
  %223 = vmatprep.mubr.f32.mxu0 0.0
  %224 = vmatmul.mubr.f32.gmra.mrb[0].mxu0 %v148
  %v225 = vpop.f32.mrb[0].mxu0
  %v226 = vadd.f32 %v141, %v225
  %v227 = vpop.f32.mrb[0].mxu0
  %228 = vdwg.mxu0
  %v229 = vmax.f32 %v221, 0.0
  %v230 = vmax.f32 %v226, 0.0
  %v231 = vld [vmem:[%s5] sm:$0x7]
  %v232 = vld [vmem:[%s6] sm:$0x7]
  %234 = vset.pattern.permute.xlu0 0
  %235 = vperm.xlu0 %234, %v232
  %v236 = vpop.permute.xlu0 %235
  %v239 = vsel %vm143, %v231, 0
  %v242 = vsel %vm150, %v230, 0
  %244 = vmatprep.subr.mxu0 0.0
  %245 = vmatpush1.msra.mxu0 %v229
  %246 = vmatprep.subr.mxu0 0.0
  %247 = vmatpush1.msra.mxu0 %v242
  %248 = vmatprep.subr.mxu0 0.0
  %249 = vmatpush1.msra.mxu0 0.0
  %250 = vmatprep.subr.mxu0 0.0
  %251 = vmatpush1.msra.mxu0 0.0
  %252 = vmatprep.subr.mxu0 0.0
  %253 = vmatpush1.msra.mxu0 0.0
  %254 = vmatprep.subr.mxu0 0.0
  %255 = vmatpush1.msra.mxu0 0.0
  %256 = vmatprep.subr.mxu0 0.0
  %257 = vmatpush1.msra.mxu0 0.0
  %258 = vmatprep.subr.mxu0 0.0
  %259 = vmatpush1.msra.mxu0 0.0
  %260 = vmatprep.subr.mxu0 0.0
  %261 = vmatpush1.msra.mxu0 0.0
  %262 = vmatprep.subr.mxu0 0.0
  %263 = vmatpush1.msra.mxu0 0.0
  %264 = vmatprep.subr.mxu0 0.0
  %265 = vmatpush1.msra.mxu0 0.0
  %266 = vmatprep.subr.mxu0 0.0
  %267 = vmatpush1.msra.mxu0 0.0
  %268 = vmatprep.subr.mxu0 0.0
  %269 = vmatpush1.msra.mxu0 0.0
  %270 = vmatprep.subr.mxu0 0.0
  %271 = vmatpush1.msra.mxu0 0.0
  %272 = vmatprep.subr.mxu0 0.0
  %273 = vmatpush1.msra.mxu0 0.0
  %274 = vmatprep.subr.mxu0 0.0
  %275 = vmatpush1.msra.mxu0 0.0
  %276 = vmatprep.subr.mxu0 0.0
  %277 = vmatpush1.msra.mxu0 0.0
  %278 = vmatprep.subr.mxu0 0.0
  %279 = vmatpush1.msra.mxu0 0.0
  %280 = vmatprep.subr.mxu0 0.0
  %281 = vmatpush1.msra.mxu0 0.0
  %282 = vmatprep.subr.mxu0 0.0
  %283 = vmatpush1.msra.mxu0 0.0
  %284 = vmatprep.subr.mxu0 0.0
  %285 = vmatpush1.msra.mxu0 0.0
  %286 = vmatprep.subr.mxu0 0.0
  %287 = vmatpush1.msra.mxu0 0.0
  %288 = vmatprep.subr.mxu0 0.0
  %289 = vmatpush1.msra.mxu0 0.0
  %290 = vmatprep.subr.mxu0 0.0
  %291 = vmatpush1.msra.mxu0 0.0
  %292 = vmatprep.subr.mxu0 0.0
  %293 = vmatpush1.msra.mxu0 0.0
  %294 = vmatprep.subr.mxu0 0.0
  %295 = vmatpush1.msra.mxu0 0.0
  %296 = vmatprep.subr.mxu0 0.0
  %297 = vmatpush1.msra.mxu0 0.0
  %298 = vmatprep.subr.mxu0 0.0
  %299 = vmatpush1.msra.mxu0 0.0
  %300 = vmatprep.subr.mxu0 0.0
  %301 = vmatpush1.msra.mxu0 0.0
  %302 = vmatprep.subr.mxu0 0.0
  %303 = vmatpush1.msra.mxu0 0.0
  %304 = vmatprep.subr.mxu0 0.0
  %305 = vmatpush1.msra.mxu0 0.0
  %306 = vmatprep.subr.mxu0 0.0
  %307 = vmatpush1.msra.mxu0 0.0
  %308 = vmatprep.mubr.f32.mxu0 0.0
  %309 = vmatmul.mubr.f32.gmra.mrb[0].mxu0 %v239
  %v310 = vpop.f32.mrb[0].mxu0
  %v311 = vadd.f32 %v236, %v310
  %v312 = vpop.f32.mrb[0].mxu0
  %313 = vdwg.mxu0
  %314 = vst [vmem:[%s7] sm:$0x7] %v311
  // Predicated region
  $region30: #{mlp_forward.1} parent=0 // pred_check
    _
  $region31: #{mlp_forward.1} parent=0 // pred_check_branch
    %316 = sbr.rel (0) target = $region33
  $region32: #{mlp_forward.1} parent=0 // pred_region
    _
  $region33: #{mlp_forward.1} parent=0 // pred_fallthru
    _
  // Predicated region
  $region34: #{mlp_forward.1} parent=0 // pred_check
    _
  $region35: #{mlp_forward.1} parent=0 // pred_check_branch
    %318 = sbr.rel (0) target = $region37
  $region36: #{mlp_forward.1} parent=0 // pred_region
    _
  $region37: #{mlp_forward.1} parent=0 // pred_fallthru
    _

</llo_original>
